<compile_context>
chip_gen: v7x
topology: tpu7x:2x2x1
jax: 0.10.0
libtpu: 0.0.40
codegen_flags: <defaults>
</compile_context>

<pallas_src>
import jax
import jax.numpy as jnp
from jax.experimental import pallas as pl
from jax.experimental.pallas import tpu as pltpu


def _round_up(x, m):
    return (x + m - 1) // m * m


def _residual_block_kernel(a_ref, x_all_ref, x_row_ref, wg_ref, ws_ref,
                           scale_ref, shift_ref, bs_ref, out_ref):
    # GCNConv: aggregate-then-transform (associativity: A @ (X W) == (A @ X) W).
    agg = jnp.dot(a_ref[...], x_all_ref[...],
                  preferred_element_type=jnp.float32)            # (tm, Cin)
    h = jnp.dot(agg, wg_ref[...],
                preferred_element_type=jnp.float32)              # (tm, Cout)

    # BatchNorm1d (eval) with the GCN bias folded into shift: h*scale + shift.
    h = h * scale_ref[...] + shift_ref[...]
    h = jnp.maximum(h, 0.0)                                      # ReLU

    # TODO(synk): Dropout is eval-mode identity here; training-mode dropout
    # would draw a Bernoulli mask via pltpu.prng_seed + pltpu.stateful_bernoulli.

    # Shortcut Linear on this row tile of x.
    residual = jnp.dot(x_row_ref[...], ws_ref[...],
                       preferred_element_type=jnp.float32) + bs_ref[...]

    out_ref[...] = jnp.maximum(h + residual, 0.0).astype(out_ref.dtype)


def residual_block_forward(x, a_norm, wg, bg, ws, bs,
                           gamma, beta, running_mean, running_var,
                           *, eps=1e-5, tm=128):
    """ResidualBlock forward.

    x:            (N, C_in)  node features
    a_norm:       (N, N)     dense D^-1/2 (A+I) D^-1/2 (built from edge_index)
    wg, bg:       GCNConv lin weight (C_out, C_in) [torch layout] and bias (C_out,)
    ws, bs:       shortcut Linear weight (C_out, C_in) and bias (C_out,)
    gamma, beta, running_mean, running_var: BatchNorm1d params/stats (C_out,)
    Returns (N, C_out).
    """
    n, c_in = x.shape
    c_out = wg.shape[0]
    f32 = jnp.float32

    # Pad for lane-dense (multiples of 128) / aligned row tiles.
    n_pad = _round_up(n, tm)
    ci_pad = _round_up(c_in, 128)
    co_pad = _round_up(c_out, 128)

    x_p = jnp.zeros((n_pad, ci_pad), f32).at[:n, :c_in].set(x.astype(f32))
    a_p = jnp.zeros((n_pad, n_pad), f32).at[:n, :n].set(a_norm.astype(f32))
    # Pre-transpose weights in glue -> no in-kernel .T / XLU transpose.
    wg_p = jnp.zeros((ci_pad, co_pad), f32).at[:c_in, :c_out].set(wg.T.astype(f32))
    ws_p = jnp.zeros((ci_pad, co_pad), f32).at[:c_in, :c_out].set(ws.T.astype(f32))

    # Fold BN affine + GCN bias: BN(h + bg) = h*scale + (scale*(bg - mean) + beta)
    scale = gamma.astype(f32) * jax.lax.rsqrt(running_var.astype(f32) + eps)
    shift = scale * (bg.astype(f32) - running_mean.astype(f32)) + beta.astype(f32)
    scale_p = jnp.zeros((1, co_pad), f32).at[0, :c_out].set(scale)
    shift_p = jnp.zeros((1, co_pad), f32).at[0, :c_out].set(shift)
    bs_p = jnp.zeros((1, co_pad), f32).at[0, :c_out].set(bs.astype(f32))

    grid = (n_pad // tm,)
    out = pl.pallas_call(
        _residual_block_kernel,
        out_shape=jax.ShapeDtypeStruct((n_pad, co_pad), f32),
        grid=grid,
        in_specs=[
            pl.BlockSpec((tm, n_pad), lambda i: (i, 0)),       # A_norm row tile
            pl.BlockSpec((n_pad, ci_pad), lambda i: (0, 0)),   # full X (resident)
            pl.BlockSpec((tm, ci_pad), lambda i: (i, 0)),      # X row tile (shortcut)
            pl.BlockSpec((ci_pad, co_pad), lambda i: (0, 0)),  # GCN weight (pre-T)
            pl.BlockSpec((ci_pad, co_pad), lambda i: (0, 0)),  # shortcut weight (pre-T)
            pl.BlockSpec((1, co_pad), lambda i: (0, 0)),       # BN scale
            pl.BlockSpec((1, co_pad), lambda i: (0, 0)),       # BN shift (+ GCN bias)
            pl.BlockSpec((1, co_pad), lambda i: (0, 0)),       # shortcut bias
        ],
        out_specs=pl.BlockSpec((tm, co_pad), lambda i: (i, 0)),
        compiler_params=pltpu.CompilerParams(
            dimension_semantics=("parallel",)),
    )(a_p, x_p, x_p, wg_p, ws_p, scale_p, shift_p, bs_p)

    return out[:n, :c_out]


def gcn_norm_dense(edge_index, num_nodes):
    """Dense symmetric-normalized adjacency with self loops (GCNConv default)."""
    src = edge_index[0]
    dst = edge_index[1]
    a = jnp.zeros((num_nodes, num_nodes), jnp.float32)
    a = a.at[dst, src].set(1.0)
    a = jnp.maximum(a, a.T)                          # symmetrize (undirected)
    eye = jnp.eye(num_nodes, dtype=jnp.float32)
    a = a * (1.0 - eye) + eye                        # drop dup self-edges, add self loops
    deg = a.sum(axis=1)
    dinv = jax.lax.rsqrt(deg)
    return dinv[:, None] * a * dinv[None, :]


def _reference(x, a_norm, wg, bg, ws, bs, gamma, beta, mean, var, eps=1e-5):
    h = a_norm @ (x @ wg.T) + bg
    h = gamma * (h - mean) / jnp.sqrt(var + eps) + beta
    h = jnp.maximum(h, 0.0)
    residual = x @ ws.T + bs
    return jnp.maximum(h + residual, 0.0)


if __name__ == "__main__":
    num_nodes = 64
    in_channels = 32
    out_channels = 48
    num_edges = 128

    key = jax.random.PRNGKey(0)
    kx, ke, kwg, kws, km, kv = jax.random.split(key, 6)

    x = jax.random.normal(kx, (num_nodes, in_channels), dtype=jnp.float32)
    edge_index = jax.random.randint(ke, (2, num_edges), 0, num_nodes)
    a_norm = gcn_norm_dense(edge_index, num_nodes)

    # Parameters mirroring reset_parameters():
    gain = 2.0 ** 0.5                                # calculate_gain('relu')
    lim_g = gain * (6.0 / (in_channels + out_channels)) ** 0.5
    wg = jax.random.uniform(kwg, (out_channels, in_channels), jnp.float32,
                            -lim_g, lim_g)           # conv1.lin.weight (xavier, relu gain)
    bg = jnp.zeros((out_channels,), jnp.float32)     # conv1.bias = 0
    lim_s = (6.0 / (in_channels + out_channels)) ** 0.5
    ws = jax.random.uniform(kws, (out_channels, in_channels), jnp.float32,
                            -lim_s, lim_s)           # shortcut.weight (xavier, gain=1)
    bs = jnp.zeros((out_channels,), jnp.float32)     # shortcut.bias = 0
    gamma = jnp.ones((out_channels,), jnp.float32)   # bn1.weight = 1
    beta = jnp.zeros((out_channels,), jnp.float32)   # bn1.bias = 0
    # Non-trivial running stats (as after training) so the BN path is exercised.
    running_mean = 0.1 * jax.random.normal(km, (out_channels,), dtype=jnp.float32)
    running_var = jax.random.uniform(kv, (out_channels,), jnp.float32, 0.5, 1.5)

    out = residual_block_forward(x, a_norm, wg, bg, ws, bs,
                                 gamma, beta, running_mean, running_var)
    out = jax.block_until_ready(out)

    ref = _reference(x, a_norm, wg, bg, ws, bs, gamma, beta,
                     running_mean, running_var)
    assert out.shape == (num_nodes, out_channels)
    assert jnp.allclose(out, ref, atol=1e-5, rtol=1e-5), "mismatch vs reference"

    print("KERNEL_OK")
</pallas_src>

<mosaic_0001>
module attributes {stable_mosaic.version = 11 : i64} {
  func.func @_residual_block_kernel(%arg0: i32, %arg1: memref<128x128xf32, #tpu.memory_space<vmem>>, %arg2: memref<128x128xf32, #tpu.memory_space<vmem>>, %arg3: memref<128x128xf32, #tpu.memory_space<vmem>>, %arg4: memref<128x128xf32, #tpu.memory_space<vmem>>, %arg5: memref<128x128xf32, #tpu.memory_space<vmem>>, %arg6: memref<1x128xf32, #tpu.memory_space<vmem>>, %arg7: memref<1x128xf32, #tpu.memory_space<vmem>>, %arg8: memref<1x128xf32, #tpu.memory_space<vmem>>, %arg9: memref<128x128xf32, #tpu.memory_space<vmem>>) attributes {dimension_semantics = [#tpu.dimension_semantics<parallel>], iteration_bounds = array<i64: 1>, scalar_prefetch = 0 : i64, scratch_operands = 0 : i64, tpu.core_type = #tpu.core_type<tc>, window_params = [{transform_indices = @transform_0, window_bounds = array<i64: 128, 128>}, {pipeline_mode = #tpu.pipeline_mode<synchronous>, transform_indices = @transform_1, window_bounds = array<i64: 128, 128>}, {transform_indices = @transform_2, window_bounds = array<i64: 128, 128>}, {pipeline_mode = #tpu.pipeline_mode<synchronous>, transform_indices = @transform_3, window_bounds = array<i64: 128, 128>}, {pipeline_mode = #tpu.pipeline_mode<synchronous>, transform_indices = @transform_4, window_bounds = array<i64: 128, 128>}, {pipeline_mode = #tpu.pipeline_mode<synchronous>, transform_indices = @transform_5, window_bounds = array<i64: 1, 128>}, {pipeline_mode = #tpu.pipeline_mode<synchronous>, transform_indices = @transform_6, window_bounds = array<i64: 1, 128>}, {pipeline_mode = #tpu.pipeline_mode<synchronous>, transform_indices = @transform_7, window_bounds = array<i64: 1, 128>}, {transform_indices = @transform_8, window_bounds = array<i64: 128, 128>}]} {
    %c0 = arith.constant 0 : index
    %c0_0 = arith.constant 0 : index
    %0 = vector.load %arg1[%c0, %c0_0] : memref<128x128xf32, #tpu.memory_space<vmem>>, vector<128x128xf32>
    %c0_1 = arith.constant 0 : index
    %c0_2 = arith.constant 0 : index
    %1 = vector.load %arg2[%c0_1, %c0_2] : memref<128x128xf32, #tpu.memory_space<vmem>>, vector<128x128xf32>
    %cst = arith.constant dense<0.000000e+00> : vector<128x128xf32>
    %2 = tpu.matmul %0, %1, %cst {dimension_numbers = #tpu.dot_dimension_numbers<[1], [0], [0], [1], [0, 0, 1, 1], [], []>} : vector<128x128xf32>, vector<128x128xf32>, vector<128x128xf32> -> vector<128x128xf32>
    %c0_3 = arith.constant 0 : index
    %c0_4 = arith.constant 0 : index
    %3 = vector.load %arg4[%c0_3, %c0_4] : memref<128x128xf32, #tpu.memory_space<vmem>>, vector<128x128xf32>
    %cst_5 = arith.constant dense<0.000000e+00> : vector<128x128xf32>
    %4 = tpu.matmul %2, %3, %cst_5 {dimension_numbers = #tpu.dot_dimension_numbers<[1], [0], [0], [1], [0, 0, 1, 1], [], []>} : vector<128x128xf32>, vector<128x128xf32>, vector<128x128xf32> -> vector<128x128xf32>
    %c0_6 = arith.constant 0 : index
    %c0_7 = arith.constant 0 : index
    %5 = vector.load %arg6[%c0_6, %c0_7] : memref<1x128xf32, #tpu.memory_space<vmem>>, vector<1x128xf32>
    %6 = vector.broadcast %5 : vector<1x128xf32> to vector<128x128xf32>
    %7 = arith.mulf %4, %6 : vector<128x128xf32>
    %c0_8 = arith.constant 0 : index
    %c0_9 = arith.constant 0 : index
    %8 = vector.load %arg7[%c0_8, %c0_9] : memref<1x128xf32, #tpu.memory_space<vmem>>, vector<1x128xf32>
    %9 = vector.broadcast %8 : vector<1x128xf32> to vector<128x128xf32>
    %10 = arith.addf %7, %9 : vector<128x128xf32>
    %cst_10 = arith.constant 0.000000e+00 : f32
    %11 = vector.broadcast %cst_10 : f32 to vector<128x128xf32>
    %12 = arith.maximumf %10, %11 : vector<128x128xf32>
    %c0_11 = arith.constant 0 : index
    %c0_12 = arith.constant 0 : index
    %13 = vector.load %arg3[%c0_11, %c0_12] : memref<128x128xf32, #tpu.memory_space<vmem>>, vector<128x128xf32>
    %c0_13 = arith.constant 0 : index
    %c0_14 = arith.constant 0 : index
    %14 = vector.load %arg5[%c0_13, %c0_14] : memref<128x128xf32, #tpu.memory_space<vmem>>, vector<128x128xf32>
    %cst_15 = arith.constant dense<0.000000e+00> : vector<128x128xf32>
    %15 = tpu.matmul %13, %14, %cst_15 {dimension_numbers = #tpu.dot_dimension_numbers<[1], [0], [0], [1], [0, 0, 1, 1], [], []>} : vector<128x128xf32>, vector<128x128xf32>, vector<128x128xf32> -> vector<128x128xf32>
    %c0_16 = arith.constant 0 : index
    %c0_17 = arith.constant 0 : index
    %16 = vector.load %arg8[%c0_16, %c0_17] : memref<1x128xf32, #tpu.memory_space<vmem>>, vector<1x128xf32>
    %17 = vector.broadcast %16 : vector<1x128xf32> to vector<128x128xf32>
    %18 = arith.addf %15, %17 : vector<128x128xf32>
    %19 = arith.addf %12, %18 : vector<128x128xf32>
    %cst_18 = arith.constant 0.000000e+00 : f32
    %20 = vector.broadcast %cst_18 : f32 to vector<128x128xf32>
    %21 = arith.maximumf %19, %20 : vector<128x128xf32>
    %c0_19 = arith.constant 0 : index
    %c0_20 = arith.constant 0 : index
    %22 = vector.load %arg9[%c0_19, %c0_20] : memref<128x128xf32, #tpu.memory_space<vmem>>, vector<128x128xf32>
    tpu.vector_store %arg9[%c0_19, %c0_20], %21 {strides = array<i32>} : memref<128x128xf32, #tpu.memory_space<vmem>>, vector<128x128xf32>,
    return
  }
  func.func @transform_0(%arg0: i32) -> (i32, i32) {
    %c0_i32 = arith.constant 0 : i32
    %c0_i32_0 = arith.constant 0 : i32
    return %arg0, %c0_i32 : i32, i32
  }
  func.func @transform_1(%arg0: i32) -> (i32, i32) {
    %c0_i32 = arith.constant 0 : i32
    %c0_i32_0 = arith.constant 0 : i32
    %c0_i32_1 = arith.constant 0 : i32
    return %c0_i32, %c0_i32_0 : i32, i32
  }
  func.func @transform_2(%arg0: i32) -> (i32, i32) {
    %c0_i32 = arith.constant 0 : i32
    %c0_i32_0 = arith.constant 0 : i32
    return %arg0, %c0_i32 : i32, i32
  }
  func.func @transform_3(%arg0: i32) -> (i32, i32) {
    %c0_i32 = arith.constant 0 : i32
    %c0_i32_0 = arith.constant 0 : i32
    %c0_i32_1 = arith.constant 0 : i32
    return %c0_i32, %c0_i32_0 : i32, i32
  }
  func.func @transform_4(%arg0: i32) -> (i32, i32) {
    %c0_i32 = arith.constant 0 : i32
    %c0_i32_0 = arith.constant 0 : i32
    %c0_i32_1 = arith.constant 0 : i32
    return %c0_i32, %c0_i32_0 : i32, i32
  }
  func.func @transform_5(%arg0: i32) -> (i32, i32) {
    %c0_i32 = arith.constant 0 : i32
    %c0_i32_0 = arith.constant 0 : i32
    %c0_i32_1 = arith.constant 0 : i32
    return %c0_i32, %c0_i32_0 : i32, i32
  }
  func.func @transform_6(%arg0: i32) -> (i32, i32) {
    %c0_i32 = arith.constant 0 : i32
    %c0_i32_0 = arith.constant 0 : i32
    %c0_i32_1 = arith.constant 0 : i32
    return %c0_i32, %c0_i32_0 : i32, i32
  }
  func.func @transform_7(%arg0: i32) -> (i32, i32) {
    %c0_i32 = arith.constant 0 : i32
    %c0_i32_0 = arith.constant 0 : i32
    %c0_i32_1 = arith.constant 0 : i32
    return %c0_i32, %c0_i32_0 : i32, i32
  }
  func.func @transform_8(%arg0: i32) -> (i32, i32) {
    %c0_i32 = arith.constant 0 : i32
    %c0_i32_0 = arith.constant 0 : i32
    return %arg0, %c0_i32 : i32, i32
  }
}

</mosaic_0001>

<llo_original>
// kernel: tpu_custom_call.1
$region0: #{tpu_custom_call.1}
  #allocation0 [shape = 'u32[]', space=smem, size = 0x4, offset = 0x4, fixed_abs, tag = 'smem constant byte address 0x4 - core index']
  #allocation1 [shape = 'u32[144,128]{1,0:T(1,128)}', space=vmem, size = 0x12000, scoped, tag = 'internal scratch']
  %s0 = inlined_call_operand.hbm [shape: f32[128,128], index: 0, kind: input, shape index: {}]
  %s1 = inlined_call_operand.hbm [shape: f32[128,128], index: 1, kind: input, shape index: {}]
  %s2 = inlined_call_operand.hbm [shape: f32[128,128], index: 2, kind: input, shape index: {}]
  %s3 = inlined_call_operand.hbm [shape: f32[128,128], index: 3, kind: input, shape index: {}]
  %s4 = inlined_call_operand.hbm [shape: f32[128,128], index: 4, kind: input, shape index: {}]
  %s5 = inlined_call_operand.vmem [shape: f32[1,128], index: 5, kind: input, shape index: {}]
  %s6 = inlined_call_operand.vmem [shape: f32[1,128], index: 6, kind: input, shape index: {}]
  %s7 = inlined_call_operand.vmem [shape: f32[1,128], index: 7, kind: input, shape index: {}]
  %s8 = inlined_call_operand.hbm [shape: f32[128,128], index: 8, kind: output, shape index: {}]
  %s9 = sld [smem:[#allocation0]]
  $region62: #{tpu_custom_call.1} parent=0
    _
  %s11 = ssub.s32 1, %s9
  %s12 = scalar_select 0, %s11, %s9
  $region1: #{tpu_custom_call.1} parent=0
    #allocation2 [shape = 'u8[65536]{0}', space=vmem, size = 0x10000, scoped, tag = 'input window, operand 0, single buffered']
    #allocation3 [shape = 's32[1]{0}', space=sflag, size = 0x4, scoped, tag = 'scoped memory for tpu_custom_call.1']
    #allocation4 [shape = 's32[1]{0}', space=sflag, size = 0x4, scoped, tag = 'scoped memory for tpu_custom_call.1']
    #allocation5 [shape = 'u8[65536]{0}', space=vmem, size = 0x10000, scoped, tag = 'input window, operand 1, single buffered']
    #allocation6 [shape = 's32[1]{0}', space=sflag, size = 0x4, scoped, tag = 'scoped memory for tpu_custom_call.1']
    #allocation7 [shape = 'u8[65536]{0}', space=vmem, size = 0x10000, scoped, tag = 'input window, operand 2, single buffered']
    #allocation8 [shape = 'u8[65536]{0}', space=vmem, size = 0x10000, scoped, tag = 'input window, operand 3, single buffered']
    #allocation9 [shape = 's32[1]{0}', space=sflag, size = 0x4, scoped, tag = 'scoped memory for tpu_custom_call.1']
    #allocation10 [shape = 'u8[65536]{0}', space=vmem, size = 0x10000, scoped, tag = 'input window, operand 4, single buffered']
    #allocation11 [shape = 'u8[65536]{0}', space=vmem, size = 0x10000, scoped, tag = 'output window, operand 0, single buffered']
    %13 = vsyncpa [#allocation3], 0
    %14 = vsyncpa [#allocation6], 0
    %15 = vsyncpa [#allocation9], 0
    %16 = vsyncpa [#allocation4], 0
    // Predicated region
    $region2: #{tpu_custom_call.1} parent=1 // pred_check
      _
    $region3: #{tpu_custom_call.1} parent=1 // pred_check_branch
      %18 = sbr.rel (0) target = $region5
    $region4: #{tpu_custom_call.1} parent=1 // pred_region
      %s20 = ssub.s32 2048, 2048
      %21 = vsyncadd [#allocation3], %s20
      %s22 = sshll.u32 [#allocation2], 4
      %s23 = int_to_ptr.vmem [resolvable:$true] %s22
      %28 = dma.hbm_to_vmem [thread:$0]  %s0, 2048, %s23, [#allocation3], 128, 128, 8
    $region5: #{tpu_custom_call.1} parent=1 // pred_fallthru
      _
    // Predicated region
    $region6: #{tpu_custom_call.1} parent=1 // pred_check
      _
    $region7: #{tpu_custom_call.1} parent=1 // pred_check_branch
      %30 = sbr.rel (0) target = $region9
    $region8: #{tpu_custom_call.1} parent=1 // pred_region
      %s32 = ssub.s32 2048, 2048
      %33 = vsyncadd [#allocation6], %s32
      %s34 = sshll.u32 [#allocation5], 4
      %s35 = int_to_ptr.vmem [resolvable:$true] %s34
      %40 = dma.hbm_to_vmem [thread:$0]  %s1, 2048, %s35, [#allocation6], 128, 128, 8
    $region9: #{tpu_custom_call.1} parent=1 // pred_fallthru
      _
    // Predicated region
    $region10: #{tpu_custom_call.1} parent=1 // pred_check
      _
    $region11: #{tpu_custom_call.1} parent=1 // pred_check_branch
      %42 = sbr.rel (0) target = $region13
    $region12: #{tpu_custom_call.1} parent=1 // pred_region
      %s44 = ssub.s32 2048, 2048
      %45 = vsyncadd [#allocation6], %s44
      %s46 = sshll.u32 [#allocation7], 4
      %s47 = int_to_ptr.vmem [resolvable:$true] %s46
      %52 = dma.hbm_to_vmem [thread:$0]  %s2, 2048, %s47, [#allocation6], 128, 128, 8
    $region13: #{tpu_custom_call.1} parent=1 // pred_fallthru
      _
    // Predicated region
    $region14: #{tpu_custom_call.1} parent=1 // pred_check
      _
    $region15: #{tpu_custom_call.1} parent=1 // pred_check_branch
      %54 = sbr.rel (0) target = $region17
    $region16: #{tpu_custom_call.1} parent=1 // pred_region
      %s56 = ssub.s32 2048, 2048
      %57 = vsyncadd [#allocation9], %s56
      %s58 = sshll.u32 [#allocation8], 4
      %s59 = int_to_ptr.vmem [resolvable:$true] %s58
      %64 = dma.hbm_to_vmem [thread:$0]  %s3, 2048, %s59, [#allocation9], 128, 128, 8
    $region17: #{tpu_custom_call.1} parent=1 // pred_fallthru
      _
    // Predicated region
    $region18: #{tpu_custom_call.1} parent=1 // pred_check
      _
    $region19: #{tpu_custom_call.1} parent=1 // pred_check_branch
      %66 = sbr.rel (0) target = $region21
    $region20: #{tpu_custom_call.1} parent=1 // pred_region
      %s68 = ssub.s32 2048, 2048
      %69 = vsyncadd [#allocation9], %s68
      %s70 = sshll.u32 [#allocation10], 4
      %s71 = int_to_ptr.vmem [resolvable:$true] %s70
      %76 = dma.hbm_to_vmem [thread:$0]  %s4, 2048, %s71, [#allocation9], 128, 128, 8
    $region21: #{tpu_custom_call.1} parent=1 // pred_fallthru
      _
    // Predicated region
    $region22: #{tpu_custom_call.1} parent=1 // pred_check
      _
    $region23: #{tpu_custom_call.1} parent=1 // pred_check_branch
      %78 = sbr.rel (0) target = $region25
    $region24: #{tpu_custom_call.1} parent=1 // pred_region
      _
    $region25: #{tpu_custom_call.1} parent=1 // pred_fallthru
      _
    // Predicated region
    $region26: #{tpu_custom_call.1} parent=1 // pred_check
      _
    $region27: #{tpu_custom_call.1} parent=1 // pred_check_branch
      %80 = sbr.rel (0) target = $region29
    $region28: #{tpu_custom_call.1} parent=1 // pred_region
      _
    $region29: #{tpu_custom_call.1} parent=1 // pred_fallthru
      _
    // Predicated region
    $region30: #{tpu_custom_call.1} parent=1 // pred_check
      _
    $region31: #{tpu_custom_call.1} parent=1 // pred_check_branch
      %82 = sbr.rel (0) target = $region33
    $region32: #{tpu_custom_call.1} parent=1 // pred_region
      _
    $region33: #{tpu_custom_call.1} parent=1 // pred_fallthru
      _
    // Predicated region
    $region34: #{tpu_custom_call.1} parent=1 // pred_check
      _
    $region35: #{tpu_custom_call.1} parent=1 // pred_check_branch
      %84 = sbr.rel (0) target = $region37
    $region36: #{tpu_custom_call.1} parent=1 // pred_region
      %85 = dma.done [#allocation3], 2048
    $region37: #{tpu_custom_call.1} parent=1 // pred_fallthru
      _
    // Predicated region
    $region38: #{tpu_custom_call.1} parent=1 // pred_check
      _
    $region39: #{tpu_custom_call.1} parent=1 // pred_check_branch
      %87 = sbr.rel (0) target = $region41
    $region40: #{tpu_custom_call.1} parent=1 // pred_region
      %88 = dma.done [#allocation6], 2048
    $region41: #{tpu_custom_call.1} parent=1 // pred_fallthru
      _
    // Predicated region
    $region42: #{tpu_custom_call.1} parent=1 // pred_check
      _
    $region43: #{tpu_custom_call.1} parent=1 // pred_check_branch
      %90 = sbr.rel (0) target = $region45
    $region44: #{tpu_custom_call.1} parent=1 // pred_region
      %91 = dma.done [#allocation6], 2048
    $region45: #{tpu_custom_call.1} parent=1 // pred_fallthru
      _
    // Predicated region
    $region46: #{tpu_custom_call.1} parent=1 // pred_check
      _
    $region47: #{tpu_custom_call.1} parent=1 // pred_check_branch
      %93 = sbr.rel (0) target = $region49
    $region48: #{tpu_custom_call.1} parent=1 // pred_region
      %94 = dma.done [#allocation9], 2048
    $region49: #{tpu_custom_call.1} parent=1 // pred_fallthru
      _
    // Predicated region
    $region50: #{tpu_custom_call.1} parent=1 // pred_check
      _
    $region51: #{tpu_custom_call.1} parent=1 // pred_check_branch
      %96 = sbr.rel (0) target = $region53
    $region52: #{tpu_custom_call.1} parent=1 // pred_region
      %97 = dma.done [#allocation9], 2048
    $region53: #{tpu_custom_call.1} parent=1 // pred_fallthru
      _
    %v98 = vld [vmem:[#allocation2] sm:$0xff]
    %v99 = vld [vmem:[#allocation2 + $0x8] sm:$0xff]
    %v100 = vld [vmem:[#allocation2 + $0x10] sm:$0xff]
    %v101 = vld [vmem:[#allocation2 + $0x18] sm:$0xff]
    %v102 = vld [vmem:[#allocation2 + $0x20] sm:$0xff]
    %v103 = vld [vmem:[#allocation2 + $0x28] sm:$0xff]
    %v104 = vld [vmem:[#allocation2 + $0x30] sm:$0xff]
    %v105 = vld [vmem:[#allocation2 + $0x38] sm:$0xff]
    %v106 = vld [vmem:[#allocation2 + $0x40] sm:$0xff]
    %v107 = vld [vmem:[#allocation2 + $0x48] sm:$0xff]
    %v108 = vld [vmem:[#allocation2 + $0x50] sm:$0xff]
    %v109 = vld [vmem:[#allocation2 + $0x58] sm:$0xff]
    %v110 = vld [vmem:[#allocation2 + $0x60] sm:$0xff]
    %v111 = vld [vmem:[#allocation2 + $0x68] sm:$0xff]
    %v112 = vld [vmem:[#allocation2 + $0x70] sm:$0xff]
    %v113 = vld [vmem:[#allocation2 + $0x78] sm:$0xff]
    %v114 = vld [vmem:[#allocation5] sm:$0xff]
    %v115 = vld [vmem:[#allocation5 + $0x8] sm:$0xff]
    %v116 = vld [vmem:[#allocation5 + $0x10] sm:$0xff]
    %v117 = vld [vmem:[#allocation5 + $0x18] sm:$0xff]
    %v118 = vld [vmem:[#allocation5 + $0x20] sm:$0xff]
    %v119 = vld [vmem:[#allocation5 + $0x28] sm:$0xff]
    %v120 = vld [vmem:[#allocation5 + $0x30] sm:$0xff]
    %v121 = vld [vmem:[#allocation5 + $0x38] sm:$0xff]
    %v122 = vld [vmem:[#allocation5 + $0x40] sm:$0xff]
    %v123 = vld [vmem:[#allocation5 + $0x48] sm:$0xff]
    %v124 = vld [vmem:[#allocation5 + $0x50] sm:$0xff]
    %v125 = vld [vmem:[#allocation5 + $0x58] sm:$0xff]
    %v126 = vld [vmem:[#allocation5 + $0x60] sm:$0xff]
    %v127 = vld [vmem:[#allocation5 + $0x68] sm:$0xff]
    %v128 = vld [vmem:[#allocation5 + $0x70] sm:$0xff]
    %v129 = vld [vmem:[#allocation5 + $0x78] sm:$0xff]
    %130 = vmatprep.subr.mxu0 0.0
    %131 = vmatpush1.msra.mxu0 %v114
    %132 = vmatprep.subr.mxu0 0.0
    %133 = vmatpush1.msra.mxu0 %v115
    %134 = vmatprep.subr.mxu0 0.0
    %135 = vmatpush1.msra.mxu0 %v116
    %136 = vmatprep.subr.mxu0 0.0
    %137 = vmatpush1.msra.mxu0 %v117
    %138 = vmatprep.subr.mxu0 0.0
    %139 = vmatpush1.msra.mxu0 %v118
    %140 = vmatprep.subr.mxu0 0.0
    %141 = vmatpush1.msra.mxu0 %v119
    %142 = vmatprep.subr.mxu0 0.0
    %143 = vmatpush1.msra.mxu0 %v120
    %144 = vmatprep.subr.mxu0 0.0
    %145 = vmatpush1.msra.mxu0 %v121
    %146 = vmatprep.subr.mxu0 0.0
    %147 = vmatpush1.msra.mxu0 %v122
    %148 = vmatprep.subr.mxu0 0.0
    %149 = vmatpush1.msra.mxu0 %v123
    %150 = vmatprep.subr.mxu0 0.0
    %151 = vmatpush1.msra.mxu0 %v124
    %152 = vmatprep.subr.mxu0 0.0
    %153 = vmatpush1.msra.mxu0 %v125
    %154 = vmatprep.subr.mxu0 0.0
    %155 = vmatpush1.msra.mxu0 %v126
    %156 = vmatprep.subr.mxu0 0.0
    %157 = vmatpush1.msra.mxu0 %v127
    %158 = vmatprep.subr.mxu0 0.0
    %159 = vmatpush1.msra.mxu0 %v128
    %160 = vmatprep.subr.mxu0 0.0
    %161 = vmatpush1.msra.mxu0 %v129
    %162 = vmatprep.subr.mxu0 0.0
    %163 = vmatpush1.msra.mxu0 0.0
    %164 = vmatprep.subr.mxu0 0.0
    %165 = vmatpush1.msra.mxu0 0.0
    %166 = vmatprep.subr.mxu0 0.0
    %167 = vmatpush1.msra.mxu0 0.0
    %168 = vmatprep.subr.mxu0 0.0
    %169 = vmatpush1.msra.mxu0 0.0
    %170 = vmatprep.subr.mxu0 0.0
    %171 = vmatpush1.msra.mxu0 0.0
    %172 = vmatprep.subr.mxu0 0.0
    %173 = vmatpush1.msra.mxu0 0.0
    %174 = vmatprep.subr.mxu0 0.0
    %175 = vmatpush1.msra.mxu0 0.0
    %176 = vmatprep.subr.mxu0 0.0
    %177 = vmatpush1.msra.mxu0 0.0
    %178 = vmatprep.subr.mxu0 0.0
    %179 = vmatpush1.msra.mxu0 0.0
    %180 = vmatprep.subr.mxu0 0.0
    %181 = vmatpush1.msra.mxu0 0.0
    %182 = vmatprep.subr.mxu0 0.0
    %183 = vmatpush1.msra.mxu0 0.0
    %184 = vmatprep.subr.mxu0 0.0
    %185 = vmatpush1.msra.mxu0 0.0
    %186 = vmatprep.subr.mxu0 0.0
    %187 = vmatpush1.msra.mxu0 0.0
    %188 = vmatprep.subr.mxu0 0.0
    %189 = vmatpush1.msra.mxu0 0.0
    %190 = vmatprep.subr.mxu0 0.0
    %191 = vmatpush1.msra.mxu0 0.0
    %192 = vmatprep.subr.mxu0 0.0
    %193 = vmatpush1.msra.mxu0 0.0
    %194 = vmatprep.mubr.f32.mxu0 0.0
    %195 = vmatmul.mubr.f32.gmra.mrb[0].mxu0 %v98
    %v196 = vpop.f32.mrb[0].mxu0
    %v197 = vadd.f32 0.0, %v196
    %v198 = vpop.f32.mrb[0].mxu0
    %199 = vmatprep.mubr.f32.mxu0 0.0
    %200 = vmatmul.mubr.f32.gmra.mrb[0].mxu0 %v99
    %v201 = vpop.f32.mrb[0].mxu0
    %v202 = vadd.f32 0.0, %v201
    %v203 = vpop.f32.mrb[0].mxu0
    %204 = vmatprep.mubr.f32.mxu0 0.0
    %205 = vmatmul.mubr.f32.gmra.mrb[0].mxu0 %v100
    %v206 = vpop.f32.mrb[0].mxu0
    %v207 = vadd.f32 0.0, %v206
    %v208 = vpop.f32.mrb[0].mxu0
    %209 = vmatprep.mubr.f32.mxu0 0.0
    %210 = vmatmul.mubr.f32.gmra.mrb[0].mxu0 %v101
    %v211 = vpop.f32.mrb[0].mxu0
    %v212 = vadd.f32 0.0, %v211
    %v213 = vpop.f32.mrb[0].mxu0
    %214 = vmatprep.mubr.f32.mxu0 0.0
    %215 = vmatmul.mubr.f32.gmra.mrb[0].mxu0 %v102
    %v216 = vpop.f32.mrb[0].mxu0
    %v217 = vadd.f32 0.0, %v216
    %v218 = vpop.f32.mrb[0].mxu0
    %219 = vmatprep.mubr.f32.mxu0 0.0
    %220 = vmatmul.mubr.f32.gmra.mrb[0].mxu0 %v103
    %v221 = vpop.f32.mrb[0].mxu0
    %v222 = vadd.f32 0.0, %v221
    %v223 = vpop.f32.mrb[0].mxu0
    %224 = vmatprep.mubr.f32.mxu0 0.0
    %225 = vmatmul.mubr.f32.gmra.mrb[0].mxu0 %v104
    %v226 = vpop.f32.mrb[0].mxu0
    %v227 = vadd.f32 0.0, %v226
    %v228 = vpop.f32.mrb[0].mxu0
    %229 = vmatprep.mubr.f32.mxu0 0.0
    %230 = vmatmul.mubr.f32.gmra.mrb[0].mxu0 %v105
    %v231 = vpop.f32.mrb[0].mxu0
    %v232 = vadd.f32 0.0, %v231
    %v233 = vpop.f32.mrb[0].mxu0
    %234 = vmatprep.mubr.f32.mxu0 0.0
    %235 = vmatmul.mubr.f32.gmra.mrb[0].mxu0 %v106
    %v236 = vpop.f32.mrb[0].mxu0
    %v237 = vadd.f32 0.0, %v236
    %v238 = vpop.f32.mrb[0].mxu0
    %239 = vmatprep.mubr.f32.mxu0 0.0
    %240 = vmatmul.mubr.f32.gmra.mrb[0].mxu0 %v107
    %v241 = vpop.f32.mrb[0].mxu0
    %v242 = vadd.f32 0.0, %v241
    %v243 = vpop.f32.mrb[0].mxu0
    %244 = vmatprep.mubr.f32.mxu0 0.0
    %245 = vmatmul.mubr.f32.gmra.mrb[0].mxu0 %v108
    %v246 = vpop.f32.mrb[0].mxu0
    %v247 = vadd.f32 0.0, %v246
    %v248 = vpop.f32.mrb[0].mxu0
    %249 = vmatprep.mubr.f32.mxu0 0.0
    %250 = vmatmul.mubr.f32.gmra.mrb[0].mxu0 %v109
    %v251 = vpop.f32.mrb[0].mxu0
    %v252 = vadd.f32 0.0, %v251
    %v253 = vpop.f32.mrb[0].mxu0
    %254 = vmatprep.mubr.f32.mxu0 0.0
    %255 = vmatmul.mubr.f32.gmra.mrb[0].mxu0 %v110
    %v256 = vpop.f32.mrb[0].mxu0
    %v257 = vadd.f32 0.0, %v256
    %v258 = vpop.f32.mrb[0].mxu0
    %259 = vmatprep.mubr.f32.mxu0 0.0
    %260 = vmatmul.mubr.f32.gmra.mrb[0].mxu0 %v111
    %v261 = vpop.f32.mrb[0].mxu0
    %v262 = vadd.f32 0.0, %v261
    %v263 = vpop.f32.mrb[0].mxu0
    %264 = vmatprep.mubr.f32.mxu0 0.0
    %265 = vmatmul.mubr.f32.gmra.mrb[0].mxu0 %v112
    %v266 = vpop.f32.mrb[0].mxu0
    %v267 = vadd.f32 0.0, %v266
    %v268 = vpop.f32.mrb[0].mxu0
    %269 = vmatprep.mubr.f32.mxu0 0.0
    %270 = vmatmul.mubr.f32.gmra.mrb[0].mxu0 %v113
    %v271 = vpop.f32.mrb[0].mxu0
    %v272 = vadd.f32 0.0, %v271
    %v273 = vpop.f32.mrb[0].mxu0
    %274 = vdwg.mxu0
    %v275 = vld [vmem:[#allocation8] sm:$0xff]
    %v276 = vld [vmem:[#allocation8 + $0x8] sm:$0xff]
    %v277 = vld [vmem:[#allocation8 + $0x10] sm:$0xff]
    %v278 = vld [vmem:[#allocation8 + $0x18] sm:$0xff]
    %v279 = vld [vmem:[#allocation8 + $0x20] sm:$0xff]
    %v280 = vld [vmem:[#allocation8 + $0x28] sm:$0xff]
    %v281 = vld [vmem:[#allocation8 + $0x30] sm:$0xff]
    %v282 = vld [vmem:[#allocation8 + $0x38] sm:$0xff]
    %v283 = vld [vmem:[#allocation8 + $0x40] sm:$0xff]
    %v284 = vld [vmem:[#allocation8 + $0x48] sm:$0xff]
    %v285 = vld [vmem:[#allocation8 + $0x50] sm:$0xff]
    %v286 = vld [vmem:[#allocation8 + $0x58] sm:$0xff]
    %v287 = vld [vmem:[#allocation8 + $0x60] sm:$0xff]
    %v288 = vld [vmem:[#allocation8 + $0x68] sm:$0xff]
    %v289 = vld [vmem:[#allocation8 + $0x70] sm:$0xff]
    %v290 = vld [vmem:[#allocation8 + $0x78] sm:$0xff]
    %291 = vmatprep.subr.mxu0 0.0
    %292 = vmatpush1.msra.mxu0 %v275
    %293 = vmatprep.subr.mxu0 0.0
    %294 = vmatpush1.msra.mxu0 %v276
    %295 = vmatprep.subr.mxu0 0.0
    %296 = vmatpush1.msra.mxu0 %v277
    %297 = vmatprep.subr.mxu0 0.0
    %298 = vmatpush1.msra.mxu0 %v278
    %299 = vmatprep.subr.mxu0 0.0
    %300 = vmatpush1.msra.mxu0 %v279
    %301 = vmatprep.subr.mxu0 0.0
    %302 = vmatpush1.msra.mxu0 %v280
    %303 = vmatprep.subr.mxu0 0.0
    %304 = vmatpush1.msra.mxu0 %v281
    %305 = vmatprep.subr.mxu0 0.0
    %306 = vmatpush1.msra.mxu0 %v282
    %307 = vmatprep.subr.mxu0 0.0
    %308 = vmatpush1.msra.mxu0 %v283
    %309 = vmatprep.subr.mxu0 0.0
    %310 = vmatpush1.msra.mxu0 %v284
    %311 = vmatprep.subr.mxu0 0.0
    %312 = vmatpush1.msra.mxu0 %v285
    %313 = vmatprep.subr.mxu0 0.0
    %314 = vmatpush1.msra.mxu0 %v286
    %315 = vmatprep.subr.mxu0 0.0
    %316 = vmatpush1.msra.mxu0 %v287
    %317 = vmatprep.subr.mxu0 0.0
    %318 = vmatpush1.msra.mxu0 %v288
    %319 = vmatprep.subr.mxu0 0.0
    %320 = vmatpush1.msra.mxu0 %v289
    %321 = vmatprep.subr.mxu0 0.0
    %322 = vmatpush1.msra.mxu0 %v290
    %323 = vmatprep.subr.mxu0 0.0
    %324 = vmatpush1.msra.mxu0 0.0
    %325 = vmatprep.subr.mxu0 0.0
    %326 = vmatpush1.msra.mxu0 0.0
    %327 = vmatprep.subr.mxu0 0.0
    %328 = vmatpush1.msra.mxu0 0.0
    %329 = vmatprep.subr.mxu0 0.0
    %330 = vmatpush1.msra.mxu0 0.0
    %331 = vmatprep.subr.mxu0 0.0
    %332 = vmatpush1.msra.mxu0 0.0
    %333 = vmatprep.subr.mxu0 0.0
    %334 = vmatpush1.msra.mxu0 0.0
    %335 = vmatprep.subr.mxu0 0.0
    %336 = vmatpush1.msra.mxu0 0.0
    %337 = vmatprep.subr.mxu0 0.0
    %338 = vmatpush1.msra.mxu0 0.0
    %339 = vmatprep.subr.mxu0 0.0
    %340 = vmatpush1.msra.mxu0 0.0
    %341 = vmatprep.subr.mxu0 0.0
    %342 = vmatpush1.msra.mxu0 0.0
    %343 = vmatprep.subr.mxu0 0.0
    %344 = vmatpush1.msra.mxu0 0.0
    %345 = vmatprep.subr.mxu0 0.0
    %346 = vmatpush1.msra.mxu0 0.0
    %347 = vmatprep.subr.mxu0 0.0
    %348 = vmatpush1.msra.mxu0 0.0
    %349 = vmatprep.subr.mxu0 0.0
    %350 = vmatpush1.msra.mxu0 0.0
    %351 = vmatprep.subr.mxu0 0.0
    %352 = vmatpush1.msra.mxu0 0.0
    %353 = vmatprep.subr.mxu0 0.0
    %354 = vmatpush1.msra.mxu0 0.0
    %355 = vmatprep.mubr.f32.mxu0 0.0
    %356 = vmatmul.mubr.f32.gmra.mrb[0].mxu0 %v197
    %v357 = vpop.f32.mrb[0].mxu0
    %v358 = vadd.f32 0.0, %v357
    %v359 = vpop.f32.mrb[0].mxu0
    %360 = vmatprep.mubr.f32.mxu0 0.0
    %361 = vmatmul.mubr.f32.gmra.mrb[0].mxu0 %v202
    %v362 = vpop.f32.mrb[0].mxu0
    %v363 = vadd.f32 0.0, %v362
    %v364 = vpop.f32.mrb[0].mxu0
    %365 = vmatprep.mubr.f32.mxu0 0.0
    %366 = vmatmul.mubr.f32.gmra.mrb[0].mxu0 %v207
    %v367 = vpop.f32.mrb[0].mxu0
    %v368 = vadd.f32 0.0, %v367
    %v369 = vpop.f32.mrb[0].mxu0
    %370 = vmatprep.mubr.f32.mxu0 0.0
    %371 = vmatmul.mubr.f32.gmra.mrb[0].mxu0 %v212
    %v372 = vpop.f32.mrb[0].mxu0
    %v373 = vadd.f32 0.0, %v372
    %v374 = vpop.f32.mrb[0].mxu0
    %375 = vmatprep.mubr.f32.mxu0 0.0
    %376 = vmatmul.mubr.f32.gmra.mrb[0].mxu0 %v217
    %v377 = vpop.f32.mrb[0].mxu0
    %v378 = vadd.f32 0.0, %v377
    %v379 = vpop.f32.mrb[0].mxu0
    %380 = vmatprep.mubr.f32.mxu0 0.0
    %381 = vmatmul.mubr.f32.gmra.mrb[0].mxu0 %v222
    %v382 = vpop.f32.mrb[0].mxu0
    %v383 = vadd.f32 0.0, %v382
    %v384 = vpop.f32.mrb[0].mxu0
    %385 = vmatprep.mubr.f32.mxu0 0.0
    %386 = vmatmul.mubr.f32.gmra.mrb[0].mxu0 %v227
    %v387 = vpop.f32.mrb[0].mxu0
    %v388 = vadd.f32 0.0, %v387
    %v389 = vpop.f32.mrb[0].mxu0
    %390 = vmatprep.mubr.f32.mxu0 0.0
    %391 = vmatmul.mubr.f32.gmra.mrb[0].mxu0 %v232
    %v392 = vpop.f32.mrb[0].mxu0
    %v393 = vadd.f32 0.0, %v392
    %v394 = vpop.f32.mrb[0].mxu0
    %395 = vmatprep.mubr.f32.mxu0 0.0
    %396 = vmatmul.mubr.f32.gmra.mrb[0].mxu0 %v237
    %v397 = vpop.f32.mrb[0].mxu0
    %v398 = vadd.f32 0.0, %v397
    %v399 = vpop.f32.mrb[0].mxu0
    %400 = vmatprep.mubr.f32.mxu0 0.0
    %401 = vmatmul.mubr.f32.gmra.mrb[0].mxu0 %v242
    %v402 = vpop.f32.mrb[0].mxu0
    %v403 = vadd.f32 0.0, %v402
    %v404 = vpop.f32.mrb[0].mxu0
    %405 = vmatprep.mubr.f32.mxu0 0.0
    %406 = vmatmul.mubr.f32.gmra.mrb[0].mxu0 %v247
    %v407 = vpop.f32.mrb[0].mxu0
    %v408 = vadd.f32 0.0, %v407
    %v409 = vpop.f32.mrb[0].mxu0
    %410 = vmatprep.mubr.f32.mxu0 0.0
    %411 = vmatmul.mubr.f32.gmra.mrb[0].mxu0 %v252
    %v412 = vpop.f32.mrb[0].mxu0
    %v413 = vadd.f32 0.0, %v412
    %v414 = vpop.f32.mrb[0].mxu0
    %415 = vmatprep.mubr.f32.mxu0 0.0
    %416 = vmatmul.mubr.f32.gmra.mrb[0].mxu0 %v257
    %v417 = vpop.f32.mrb[0].mxu0
    %v418 = vadd.f32 0.0, %v417
    %v419 = vpop.f32.mrb[0].mxu0
    %420 = vmatprep.mubr.f32.mxu0 0.0
    %421 = vmatmul.mubr.f32.gmra.mrb[0].mxu0 %v262
    %v422 = vpop.f32.mrb[0].mxu0
    %v423 = vadd.f32 0.0, %v422
    %v424 = vpop.f32.mrb[0].mxu0
    %425 = vmatprep.mubr.f32.mxu0 0.0
    %426 = vmatmul.mubr.f32.gmra.mrb[0].mxu0 %v267
    %v427 = vpop.f32.mrb[0].mxu0
    %v428 = vadd.f32 0.0, %v427
    %v429 = vpop.f32.mrb[0].mxu0
    %430 = vmatprep.mubr.f32.mxu0 0.0
    %431 = vmatmul.mubr.f32.gmra.mrb[0].mxu0 %v272
    %v432 = vpop.f32.mrb[0].mxu0
    %v433 = vadd.f32 0.0, %v432
    %v434 = vpop.f32.mrb[0].mxu0
    %435 = vdwg.mxu0
    %v436 = vld [vmem:[%s5] sm:$0x1]
    %v438 = vlaneseq
    %v439 = vshrl.u32 %v438, 7
    %v440 = vsub.s32 0, %v439
    %v441 = vrot.slane %v436, %v440
    %v443 = vmul.f32 %v358, %v441
    %v444 = vmul.f32 %v363, %v441
    %v445 = vmul.f32 %v368, %v441
    %v446 = vmul.f32 %v373, %v441
    %v447 = vmul.f32 %v378, %v441
    %v448 = vmul.f32 %v383, %v441
    %v449 = vmul.f32 %v388, %v441
    %v450 = vmul.f32 %v393, %v441
    %v451 = vmul.f32 %v398, %v441
    %v452 = vmul.f32 %v403, %v441
    %v453 = vmul.f32 %v408, %v441
    %v454 = vmul.f32 %v413, %v441
    %v455 = vmul.f32 %v418, %v441
    %v456 = vmul.f32 %v423, %v441
    %v457 = vmul.f32 %v428, %v441
    %v458 = vmul.f32 %v433, %v441
    %v459 = vld [vmem:[%s6] sm:$0x1]
    %v461 = vlaneseq
    %v462 = vshrl.u32 %v461, 7
    %v463 = vsub.s32 0, %v462
    %v464 = vrot.slane %v459, %v463
    %v466 = vadd.f32 %v443, %v464
    %v467 = vadd.f32 %v444, %v464
    %v468 = vadd.f32 %v445, %v464
    %v469 = vadd.f32 %v446, %v464
    %v470 = vadd.f32 %v447, %v464
    %v471 = vadd.f32 %v448, %v464
    %v472 = vadd.f32 %v449, %v464
    %v473 = vadd.f32 %v450, %v464
    %v474 = vadd.f32 %v451, %v464
    %v475 = vadd.f32 %v452, %v464
    %v476 = vadd.f32 %v453, %v464
    %v477 = vadd.f32 %v454, %v464
    %v478 = vadd.f32 %v455, %v464
    %v479 = vadd.f32 %v456, %v464
    %v480 = vadd.f32 %v457, %v464
    %v481 = vadd.f32 %v458, %v464
    %v482 = vmax.f32 %v466, 0.0
    %v483 = vmax.f32 %v467, 0.0
    %v484 = vmax.f32 %v468, 0.0
    %v485 = vmax.f32 %v469, 0.0
    %v486 = vmax.f32 %v470, 0.0
    %v487 = vmax.f32 %v471, 0.0
    %v488 = vmax.f32 %v472, 0.0
    %v489 = vmax.f32 %v473, 0.0
    %v490 = vmax.f32 %v474, 0.0
    %v491 = vmax.f32 %v475, 0.0
    %v492 = vmax.f32 %v476, 0.0
    %v493 = vmax.f32 %v477, 0.0
    %v494 = vmax.f32 %v478, 0.0
    %v495 = vmax.f32 %v479, 0.0
    %v496 = vmax.f32 %v480, 0.0
    %v497 = vmax.f32 %v481, 0.0
    %v498 = vld [vmem:[#allocation7] sm:$0xff]
    %v499 = vld [vmem:[#allocation7 + $0x8] sm:$0xff]
    %v500 = vld [vmem:[#allocation7 + $0x10] sm:$0xff]
    %v501 = vld [vmem:[#allocation7 + $0x18] sm:$0xff]
    %v502 = vld [vmem:[#allocation7 + $0x20] sm:$0xff]
    %v503 = vld [vmem:[#allocation7 + $0x28] sm:$0xff]
    %v504 = vld [vmem:[#allocation7 + $0x30] sm:$0xff]
    %v505 = vld [vmem:[#allocation7 + $0x38] sm:$0xff]
    %v506 = vld [vmem:[#allocation7 + $0x40] sm:$0xff]
    %v507 = vld [vmem:[#allocation7 + $0x48] sm:$0xff]
    %v508 = vld [vmem:[#allocation7 + $0x50] sm:$0xff]
    %v509 = vld [vmem:[#allocation7 + $0x58] sm:$0xff]
    %v510 = vld [vmem:[#allocation7 + $0x60] sm:$0xff]
    %v511 = vld [vmem:[#allocation7 + $0x68] sm:$0xff]
    %v512 = vld [vmem:[#allocation7 + $0x70] sm:$0xff]
    %v513 = vld [vmem:[#allocation7 + $0x78] sm:$0xff]
    %v514 = vld [vmem:[#allocation10] sm:$0xff]
    %v515 = vld [vmem:[#allocation10 + $0x8] sm:$0xff]
    %v516 = vld [vmem:[#allocation10 + $0x10] sm:$0xff]
    %v517 = vld [vmem:[#allocation10 + $0x18] sm:$0xff]
    %v518 = vld [vmem:[#allocation10 + $0x20] sm:$0xff]
    %v519 = vld [vmem:[#allocation10 + $0x28] sm:$0xff]
    %v520 = vld [vmem:[#allocation10 + $0x30] sm:$0xff]
    %v521 = vld [vmem:[#allocation10 + $0x38] sm:$0xff]
    %v522 = vld [vmem:[#allocation10 + $0x40] sm:$0xff]
    %v523 = vld [vmem:[#allocation10 + $0x48] sm:$0xff]
    %v524 = vld [vmem:[#allocation10 + $0x50] sm:$0xff]
    %v525 = vld [vmem:[#allocation10 + $0x58] sm:$0xff]
    %v526 = vld [vmem:[#allocation10 + $0x60] sm:$0xff]
    %v527 = vld [vmem:[#allocation10 + $0x68] sm:$0xff]
    %v528 = vld [vmem:[#allocation10 + $0x70] sm:$0xff]
    %v529 = vld [vmem:[#allocation10 + $0x78] sm:$0xff]
    %v530 = vld [vmem:[%s7] sm:$0x1]
    %v532 = vlaneseq
    %v533 = vshrl.u32 %v532, 7
    %v534 = vsub.s32 0, %v533
    %v535 = vrot.slane %v530, %v534
    %537 = vmatprep.subr.mxu0 0.0
    %538 = vmatpush1.msra.mxu0 %v514
    %539 = vmatprep.subr.mxu0 0.0
    %540 = vmatpush1.msra.mxu0 %v515
    %541 = vmatprep.subr.mxu0 0.0
    %542 = vmatpush1.msra.mxu0 %v516
    %543 = vmatprep.subr.mxu0 0.0
    %544 = vmatpush1.msra.mxu0 %v517
    %545 = vmatprep.subr.mxu0 0.0
    %546 = vmatpush1.msra.mxu0 %v518
    %547 = vmatprep.subr.mxu0 0.0
    %548 = vmatpush1.msra.mxu0 %v519
    %549 = vmatprep.subr.mxu0 0.0
    %550 = vmatpush1.msra.mxu0 %v520
    %551 = vmatprep.subr.mxu0 0.0
    %552 = vmatpush1.msra.mxu0 %v521
    %553 = vmatprep.subr.mxu0 0.0
    %554 = vmatpush1.msra.mxu0 %v522
    %555 = vmatprep.subr.mxu0 0.0
    %556 = vmatpush1.msra.mxu0 %v523
    %557 = vmatprep.subr.mxu0 0.0
    %558 = vmatpush1.msra.mxu0 %v524
    %559 = vmatprep.subr.mxu0 0.0
    %560 = vmatpush1.msra.mxu0 %v525
    %561 = vmatprep.subr.mxu0 0.0
    %562 = vmatpush1.msra.mxu0 %v526
    %563 = vmatprep.subr.mxu0 0.0
    %564 = vmatpush1.msra.mxu0 %v527
    %565 = vmatprep.subr.mxu0 0.0
    %566 = vmatpush1.msra.mxu0 %v528
    %567 = vmatprep.subr.mxu0 0.0
    %568 = vmatpush1.msra.mxu0 %v529
    %569 = vmatprep.subr.mxu0 0.0
    %570 = vmatpush1.msra.mxu0 0.0
    %571 = vmatprep.subr.mxu0 0.0
    %572 = vmatpush1.msra.mxu0 0.0
    %573 = vmatprep.subr.mxu0 0.0
    %574 = vmatpush1.msra.mxu0 0.0
    %575 = vmatprep.subr.mxu0 0.0
    %576 = vmatpush1.msra.mxu0 0.0
    %577 = vmatprep.subr.mxu0 0.0
    %578 = vmatpush1.msra.mxu0 0.0
    %579 = vmatprep.subr.mxu0 0.0
    %580 = vmatpush1.msra.mxu0 0.0
    %581 = vmatprep.subr.mxu0 0.0
    %582 = vmatpush1.msra.mxu0 0.0
    %583 = vmatprep.subr.mxu0 0.0
    %584 = vmatpush1.msra.mxu0 0.0
    %585 = vmatprep.subr.mxu0 0.0
    %586 = vmatpush1.msra.mxu0 0.0
    %587 = vmatprep.subr.mxu0 0.0
    %588 = vmatpush1.msra.mxu0 0.0
    %589 = vmatprep.subr.mxu0 0.0
    %590 = vmatpush1.msra.mxu0 0.0
    %591 = vmatprep.subr.mxu0 0.0
    %592 = vmatpush1.msra.mxu0 0.0
    %593 = vmatprep.subr.mxu0 0.0
    %594 = vmatpush1.msra.mxu0 0.0
    %595 = vmatprep.subr.mxu0 0.0
    %596 = vmatpush1.msra.mxu0 0.0
    %597 = vmatprep.subr.mxu0 0.0
    %598 = vmatpush1.msra.mxu0 0.0
    %599 = vmatprep.subr.mxu0 0.0
    %600 = vmatpush1.msra.mxu0 0.0
    %601 = vmatprep.mubr.f32.mxu0 0.0
    %602 = vmatmul.mubr.f32.gmra.mrb[0].mxu0 %v498
    %v603 = vpop.f32.mrb[0].mxu0
    %v604 = vadd.f32 %v535, %v603
    %v605 = vpop.f32.mrb[0].mxu0
    %606 = vmatprep.mubr.f32.mxu0 0.0
    %607 = vmatmul.mubr.f32.gmra.mrb[0].mxu0 %v499
    %v608 = vpop.f32.mrb[0].mxu0
    %v609 = vadd.f32 %v535, %v608
    %v610 = vpop.f32.mrb[0].mxu0
    %611 = vmatprep.mubr.f32.mxu0 0.0
    %612 = vmatmul.mubr.f32.gmra.mrb[0].mxu0 %v500
    %v613 = vpop.f32.mrb[0].mxu0
    %v614 = vadd.f32 %v535, %v613
    %v615 = vpop.f32.mrb[0].mxu0
    %616 = vmatprep.mubr.f32.mxu0 0.0
    %617 = vmatmul.mubr.f32.gmra.mrb[0].mxu0 %v501
    %v618 = vpop.f32.mrb[0].mxu0
    %v619 = vadd.f32 %v535, %v618
    %v620 = vpop.f32.mrb[0].mxu0
    %621 = vmatprep.mubr.f32.mxu0 0.0
    %622 = vmatmul.mubr.f32.gmra.mrb[0].mxu0 %v502
    %v623 = vpop.f32.mrb[0].mxu0
    %v624 = vadd.f32 %v535, %v623
    %v625 = vpop.f32.mrb[0].mxu0
    %626 = vmatprep.mubr.f32.mxu0 0.0
    %627 = vmatmul.mubr.f32.gmra.mrb[0].mxu0 %v503
    %v628 = vpop.f32.mrb[0].mxu0
    %v629 = vadd.f32 %v535, %v628
    %v630 = vpop.f32.mrb[0].mxu0
    %631 = vmatprep.mubr.f32.mxu0 0.0
    %632 = vmatmul.mubr.f32.gmra.mrb[0].mxu0 %v504
    %v633 = vpop.f32.mrb[0].mxu0
    %v634 = vadd.f32 %v535, %v633
    %v635 = vpop.f32.mrb[0].mxu0
    %636 = vmatprep.mubr.f32.mxu0 0.0
    %637 = vmatmul.mubr.f32.gmra.mrb[0].mxu0 %v505
    %v638 = vpop.f32.mrb[0].mxu0
    %v639 = vadd.f32 %v535, %v638
    %v640 = vpop.f32.mrb[0].mxu0
    %641 = vmatprep.mubr.f32.mxu0 0.0
    %642 = vmatmul.mubr.f32.gmra.mrb[0].mxu0 %v506
    %v643 = vpop.f32.mrb[0].mxu0
    %v644 = vadd.f32 %v535, %v643
    %v645 = vpop.f32.mrb[0].mxu0
    %646 = vmatprep.mubr.f32.mxu0 0.0
    %647 = vmatmul.mubr.f32.gmra.mrb[0].mxu0 %v507
    %v648 = vpop.f32.mrb[0].mxu0
    %v649 = vadd.f32 %v535, %v648
    %v650 = vpop.f32.mrb[0].mxu0
    %651 = vmatprep.mubr.f32.mxu0 0.0
    %652 = vmatmul.mubr.f32.gmra.mrb[0].mxu0 %v508
    %v653 = vpop.f32.mrb[0].mxu0
    %v654 = vadd.f32 %v535, %v653
    %v655 = vpop.f32.mrb[0].mxu0
    %656 = vmatprep.mubr.f32.mxu0 0.0
    %657 = vmatmul.mubr.f32.gmra.mrb[0].mxu0 %v509
    %v658 = vpop.f32.mrb[0].mxu0
    %v659 = vadd.f32 %v535, %v658
    %v660 = vpop.f32.mrb[0].mxu0
    %661 = vmatprep.mubr.f32.mxu0 0.0
    %662 = vmatmul.mubr.f32.gmra.mrb[0].mxu0 %v510
    %v663 = vpop.f32.mrb[0].mxu0
    %v664 = vadd.f32 %v535, %v663
    %v665 = vpop.f32.mrb[0].mxu0
    %666 = vmatprep.mubr.f32.mxu0 0.0
    %667 = vmatmul.mubr.f32.gmra.mrb[0].mxu0 %v511
    %v668 = vpop.f32.mrb[0].mxu0
    %v669 = vadd.f32 %v535, %v668
    %v670 = vpop.f32.mrb[0].mxu0
    %671 = vmatprep.mubr.f32.mxu0 0.0
    %672 = vmatmul.mubr.f32.gmra.mrb[0].mxu0 %v512
    %v673 = vpop.f32.mrb[0].mxu0
    %v674 = vadd.f32 %v535, %v673
    %v675 = vpop.f32.mrb[0].mxu0
    %676 = vmatprep.mubr.f32.mxu0 0.0
    %677 = vmatmul.mubr.f32.gmra.mrb[0].mxu0 %v513
    %v678 = vpop.f32.mrb[0].mxu0
    %v679 = vadd.f32 %v535, %v678
    %v680 = vpop.f32.mrb[0].mxu0
    %681 = vdwg.mxu0
    %v682 = vadd.f32 %v482, %v604
    %v683 = vadd.f32 %v483, %v609
    %v684 = vadd.f32 %v484, %v614
    %v685 = vadd.f32 %v485, %v619
    %v686 = vadd.f32 %v486, %v624
    %v687 = vadd.f32 %v487, %v629
    %v688 = vadd.f32 %v488, %v634
    %v689 = vadd.f32 %v489, %v639
    %v690 = vadd.f32 %v490, %v644
    %v691 = vadd.f32 %v491, %v649
    %v692 = vadd.f32 %v492, %v654
    %v693 = vadd.f32 %v493, %v659
    %v694 = vadd.f32 %v494, %v664
    %v695 = vadd.f32 %v495, %v669
    %v696 = vadd.f32 %v496, %v674
    %v697 = vadd.f32 %v497, %v679
    %v698 = vmax.f32 %v682, 0.0
    %v699 = vmax.f32 %v683, 0.0
    %v700 = vmax.f32 %v684, 0.0
    %v701 = vmax.f32 %v685, 0.0
    %v702 = vmax.f32 %v686, 0.0
    %v703 = vmax.f32 %v687, 0.0
    %v704 = vmax.f32 %v688, 0.0
    %v705 = vmax.f32 %v689, 0.0
    %v706 = vmax.f32 %v690, 0.0
    %v707 = vmax.f32 %v691, 0.0
    %v708 = vmax.f32 %v692, 0.0
    %v709 = vmax.f32 %v693, 0.0
    %v710 = vmax.f32 %v694, 0.0
    %v711 = vmax.f32 %v695, 0.0
    %v712 = vmax.f32 %v696, 0.0
    %v713 = vmax.f32 %v697, 0.0
    %714 = vst [vmem:[#allocation11] sm:$0xff] %v698
    %715 = vst [vmem:[#allocation11 + $0x8] sm:$0xff] %v699
    %716 = vst [vmem:[#allocation11 + $0x10] sm:$0xff] %v700
    %717 = vst [vmem:[#allocation11 + $0x18] sm:$0xff] %v701
    %718 = vst [vmem:[#allocation11 + $0x20] sm:$0xff] %v702
    %719 = vst [vmem:[#allocation11 + $0x28] sm:$0xff] %v703
    %720 = vst [vmem:[#allocation11 + $0x30] sm:$0xff] %v704
    %721 = vst [vmem:[#allocation11 + $0x38] sm:$0xff] %v705
    %722 = vst [vmem:[#allocation11 + $0x40] sm:$0xff] %v706
    %723 = vst [vmem:[#allocation11 + $0x48] sm:$0xff] %v707
    %724 = vst [vmem:[#allocation11 + $0x50] sm:$0xff] %v708
    %725 = vst [vmem:[#allocation11 + $0x58] sm:$0xff] %v709
    %726 = vst [vmem:[#allocation11 + $0x60] sm:$0xff] %v710
    %727 = vst [vmem:[#allocation11 + $0x68] sm:$0xff] %v711
    %728 = vst [vmem:[#allocation11 + $0x70] sm:$0xff] %v712
    %729 = vst [vmem:[#allocation11 + $0x78] sm:$0xff] %v713
    // Predicated region
    $region54: #{tpu_custom_call.1} parent=1 // pred_check
      _
    $region55: #{tpu_custom_call.1} parent=1 // pred_check_branch
      %731 = sbr.rel (0) target = $region57
    $region56: #{tpu_custom_call.1} parent=1 // pred_region
      %s733 = ssub.s32 2048, 2048
      %734 = vsyncadd [#allocation4], %s733
      %s735 = sshll.u32 [#allocation11], 4
      %s736 = int_to_ptr.vmem [resolvable:$true] %s735
      %741 = dma.vmem_to_hbm [thread:$0]  %s736, 2048, %s8, [#allocation4], 128, 128, 8
    $region57: #{tpu_custom_call.1} parent=1 // pred_fallthru
      _
    // Predicated region
    $region58: #{tpu_custom_call.1} parent=1 // pred_check
      _
    $region59: #{tpu_custom_call.1} parent=1 // pred_check_branch
      %743 = sbr.rel (0) target = $region61
    $region60: #{tpu_custom_call.1} parent=1 // pred_region
      %744 = dma.done [#allocation4], 2048
    $region61: #{tpu_custom_call.1} parent=1 // pred_fallthru
      _
    %745 = vsyncpa [#allocation3], 1
    %746 = vsyncpa [#allocation6], 1
    %747 = vsyncpa [#allocation9], 1
    %748 = vsyncpa [#allocation4], 1

</llo_original>
